<compile_context>
chip_gen: v5e
topology: v5e:2x2
jax: 0.10.0
libtpu: 0.0.40
codegen_flags: <defaults>
</compile_context>

<pallas_src>
import functools

import jax
import jax.numpy as jnp
import numpy as np
from jax.experimental import pallas as pl
from jax.experimental.pallas import tpu as pltpu


def _round_up(x, m):
    return ((x + m - 1) // m) * m


def _cdiv(a, b):
    return (a + b - 1) // b


def _vmem_bytes_estimate(t_tile, f, d_pad):
    """Rough per-step VMEM footprint (bytes), double-buffered where pipelined."""
    f_lanes = _round_up(f, 128)
    speech = 2 * t_tile * f_lanes * 4          # streamed f32 time tile (x2 buffers)
    weight = 2 * _round_up(f, 16) * d_pad * 2  # bf16 weight (resident)
    bias = 2 * 8 * d_pad * 4                   # f32 bias row
    out = 2 * 8 * 128 * 4                      # lane-dense f32 output tile
    acc = 8 * d_pad * 4                        # f32 vector accumulator
    y_tmp = t_tile * d_pad * 4                 # in-kernel f32 matmul result
    return speech + weight + bias + out + acc + y_tmp


def _adaptor_kernel(x_ref, w_ref, b_ref, o_ref, acc_ref, *,
                    t_true, t_tile, num_t, inv_count, needs_mask):
    """One (batch, split, time-tile) grid step: ReLU(x @ W + b) reduced into acc."""
    s = pl.program_id(1)
    t = pl.program_id(2)

    @pl.when(t == 0)
    def _init():
        acc_ref[...] = jnp.zeros_like(acc_ref)

    # Fused f32 -> bf16 cast (VPU) right before the MXU; speech is read from HBM
    # exactly once, in its original dtype.
    x = x_ref[0].astype(jnp.bfloat16)                                  # (t_tile, F)
    y = jnp.dot(x, w_ref[...], preferred_element_type=jnp.float32)    # MXU, f32 acc
    y = jnp.maximum(y + b_ref[...], 0.0)                               # bias + ReLU (f32, VPU)

    if needs_mask:
        # Boundary / duplicated tiles: zero rows at/after the true T so garbage
        # (or re-read) rows never contribute to the mean.
        row0 = (s * num_t + t) * t_tile
        rows = jax.lax.broadcasted_iota(jnp.int32, (t_tile, 1), 0) + row0
        y = jnp.where(rows < t_true, y, 0.0)

    # Sublane-only reduce per step into a vector accumulator; the cross-lane
    # (XLU) reduce happens once at the end.  Also improves f32 accuracy for long T.
    acc_ref[...] += jnp.sum(y, axis=0, keepdims=True)                  # (1, d_pad)

    @pl.when(t == pl.num_programs(2) - 1)
    def _finalize():
        val = jnp.sum(acc_ref[...]) * inv_count       # single lane reduce + scale
        # Lane-dense (1, 1, 8, 128) store; wrapper reads [:, :, 0, 0].
        o_ref[...] = jnp.full(o_ref.shape, val, dtype=o_ref.dtype)


def model_adaptor_forward(speech, weight, bias, *, t_tile=None):
    """Fused Pallas forward for ModelAdaptor with a synthesized dense+ReLU encoder.

    speech : (B, T, F) float array (any float dtype; bf16 cast is fused in-kernel)
    weight : (F, D)    encoder projection weight
    bias   : (D,)      encoder bias
    returns: (B,) float32 == mean(mean(relu(speech @ W + b), -1), -1)
    """
    B, T, F = speech.shape
    Fw, D = weight.shape
    assert Fw == F, (Fw, F)

    # Small loop-invariant operands are prepared once; the large streamed operand
    # (speech) is passed untouched.
    w_bf = weight.astype(jnp.bfloat16)
    b_f32 = bias.astype(jnp.float32)

    # Pad D to a lane multiple of 128 with zero columns: ReLU(0*x + 0) == 0, so
    # padded columns never contribute (divisor uses the true D).
    d_pad = _round_up(D, 128)
    if d_pad != D:
        w_bf = jnp.pad(w_bf, ((0, 0), (0, d_pad - D)))
        b_f32 = jnp.pad(b_f32, (0, d_pad - D))
    b_f32 = b_f32.reshape(1, d_pad)

    # Generation-aware VMEM budgeting (v7x: 64 MiB/TC; v5e/v6e: 128 MiB).
    try:
        vmem_cap = int(pltpu.get_tpu_info().vmem_capacity_bytes)
    except Exception:  # interpret mode / older runtimes: assume the smallest (v7x)
        vmem_cap = 64 * 2**20
    budget = max(8 * 2**20, min(vmem_cap // 3, 40 * 2**20))

    # When B == 1 the batch axis cannot fill v7x's two TensorCores, so split the
    # time range across a size-2 "parallel" axis (harmless size-2 serial axis on
    # single-core v5e/v6e).
    n_split = 2 if (B == 1 and T >= 256) else 1

    # Time tile: a single full-T tile per split whenever it fits the VMEM budget
    # (T*F f32 is small), otherwise large multiple-of-8 tiles so per-step overhead
    # and the K=80 weight push stay a small fraction on 256x256 MXUs.
    if t_tile is None:
        t_tile = min(_cdiv(T, n_split), 4096)
    if n_split == 1 and t_tile >= T:
        t_tile = T                       # equal-to-full-dim block: always legal, no mask
    else:
        t_tile = max(8, min(_round_up(t_tile, 8), _round_up(_cdiv(T, n_split), 8)))
    while _vmem_bytes_estimate(t_tile, F, d_pad) > budget and t_tile > 8:
        t_tile = max(8, _round_up(t_tile // 2, 8))

    total_blocks = _cdiv(T, t_tile)
    num_t = _cdiv(total_blocks, n_split)
    assert n_split * num_t * t_tile >= T
    needs_mask = (n_split * num_t * t_tile) != T

    est = _vmem_bytes_estimate(t_tile, F, d_pad)
    vmem_limit = int(min(max(32 * 2**20, 3 * est), (vmem_cap * 3) // 4))

    kernel = functools.partial(
        _adaptor_kernel,
        t_true=T,                        # T' == T: synthesized encoder does not subsample
        t_tile=t_tile,
        num_t=num_t,
        inv_count=1.0 / float(T * D),    # true (unpadded) T' * D
        needs_mask=needs_mask,
    )

    def speech_map(b, s, t):
        # Clamp so grid points past the last real time block re-read a valid block;
        # the in-kernel mask (based on the unclamped offset) zeroes their contribution.
        return (b, jnp.minimum(s * num_t + t, total_blocks - 1), 0)

    out = pl.pallas_call(
        kernel,
        out_shape=jax.ShapeDtypeStruct((B, n_split, 8, 128), jnp.float32),
        grid_spec=pltpu.PrefetchScalarGridSpec(
            num_scalar_prefetch=0,
            grid=(B, n_split, num_t),    # batch/split parallel first, time reduction last
            in_specs=[
                # Speech time-tiles stream; W and bias have constant index maps ->
                # DMA'd once and kept VMEM-resident.
                pl.BlockSpec((1, t_tile, F), speech_map),
                pl.BlockSpec((F, d_pad), lambda b, s, t: (0, 0)),
                pl.BlockSpec((1, d_pad), lambda b, s, t: (0, 0)),
            ],
            # Same output block across the time axis -> resident-accumulator
            # pattern; lane-dense (8, 128) tile avoids masked partial stores.
            out_specs=pl.BlockSpec((1, 1, 8, 128), lambda b, s, t: (b, s, 0, 0)),
            scratch_shapes=[pltpu.VMEM((1, d_pad), jnp.float32)],
        ),
        compiler_params=pltpu.CompilerParams(
            dimension_semantics=("parallel", "parallel", "arbitrary"),
            vmem_limit_bytes=vmem_limit,
        ),
    )(speech, w_bf, b_f32)

    # Per-split partials already carry the 1/(T*D) factor; sum splits, strip the
    # lane-dense padding.
    return out[:, :, 0, 0].sum(axis=1)


if __name__ == "__main__":
    key = jax.random.PRNGKey(0)
    k_speech, k_w, k_b = jax.random.split(key, 3)

    # Small ESPnet-like shapes: batch=2, frames=200, fbank features=80, enc dim=256.
    B, T, F, D = 2, 200, 80, 256
    speech = jax.random.normal(k_speech, (B, T, F), dtype=jnp.float32)
    weight = jax.random.normal(k_w, (F, D), dtype=jnp.float32) / np.sqrt(F)
    bias = 0.1 * jax.random.normal(k_b, (D,), dtype=jnp.float32)

    def reference(sp, w, b):
        # Same synthesized encoder + adaptor semantics (bf16-rounded operands, f32 math).
        xs = sp.astype(jnp.bfloat16).astype(jnp.float32)
        ws = w.astype(jnp.bfloat16).astype(jnp.float32)
        enc = jax.nn.relu(xs @ ws + b)                    # (B, T, D)
        return jnp.mean(jnp.mean(enc, axis=-1), axis=-1)  # (B,)

    out = jax.block_until_ready(model_adaptor_forward(speech, weight, bias))
    np.testing.assert_allclose(np.asarray(out), np.asarray(reference(speech, weight, bias)),
                               rtol=1e-2, atol=1e-3)

    # Second case: B == 1 with ragged T exercises the 2-way time split (fills both
    # v7x TensorCores) plus the boundary-row mask / clamped-index path.
    speech1 = jax.random.normal(jax.random.PRNGKey(1), (1, 700, F), dtype=jnp.float32)
    out1 = jax.block_until_ready(model_adaptor_forward(speech1, weight, bias))
    np.testing.assert_allclose(np.asarray(out1), np.asarray(reference(speech1, weight, bias)),
                               rtol=1e-2, atol=1e-3)

    print("KERNEL_OK")
</pallas_src>

<mosaic_0001>
module attributes {stable_mosaic.version = 11 : i64} {
  func.func @_adaptor_kernel(%arg0: i32, %arg1: i32, %arg2: i32, %arg3: memref<1x200x80xf32, #tpu.memory_space<vmem>>, %arg4: memref<80x256xbf16, #tpu.memory_space<vmem>>, %arg5: memref<1x256xf32, #tpu.memory_space<vmem>>, %arg6: memref<1x1x8x128xf32, #tpu.memory_space<vmem>>, %arg7: memref<1x256xf32, #tpu.memory_space<vmem>>) attributes {dimension_semantics = [#tpu.dimension_semantics<parallel>, #tpu.dimension_semantics<parallel>, #tpu.dimension_semantics<arbitrary>], iteration_bounds = array<i64: 2, 1, 1>, scalar_prefetch = 0 : i64, scratch_operands = 1 : i64, tpu.core_type = #tpu.core_type<tc>, window_params = [{transform_indices = @transform_0, window_bounds = array<i64: 1, 200, 80>}, {pipeline_mode = #tpu.pipeline_mode<synchronous>, transform_indices = @transform_1, window_bounds = array<i64: 80, 256>}, {pipeline_mode = #tpu.pipeline_mode<synchronous>, transform_indices = @transform_2, window_bounds = array<i64: 1, 256>}, {transform_indices = @transform_3, window_bounds = array<i64: 1, 1, 8, 128>}]} {
    %c0_i32 = arith.constant 0 : i32
    %0 = arith.cmpi eq, %arg2, %c0_i32 : i32
    %1 = arith.extui %0 : i1 to i32
    %c0_i32_0 = arith.constant 0 : i32
    %2 = arith.cmpi ne, %1, %c0_i32_0 : i32
    scf.if %2 {
      %cst_15 = arith.constant 0.000000e+00 : f32
      %21 = vector.broadcast %cst_15 : f32 to vector<1x256xf32>
      %c0_16 = arith.constant 0 : index
      %c0_17 = arith.constant 0 : index
      %22 = vector.load %arg7[%c0_16, %c0_17] : memref<1x256xf32, #tpu.memory_space<vmem>>, vector<1x256xf32>
      tpu.vector_store %arg7[%c0_16, %c0_17], %21 {strides = array<i32>} : memref<1x256xf32, #tpu.memory_space<vmem>>, vector<1x256xf32>,
    } else {
    }
    %c0 = arith.constant 0 : index
    %c0_1 = arith.constant 0 : index
    %c0_2 = arith.constant 0 : index
    %3 = vector.load %arg3[%c0, %c0_1, %c0_2] : memref<1x200x80xf32, #tpu.memory_space<vmem>>, vector<1x200x80xf32>
    %4 = vector.shape_cast %3 : vector<1x200x80xf32> to vector<200x80xf32>
    %5 = arith.truncf %4 : vector<200x80xf32> to vector<200x80xbf16>
    %c0_3 = arith.constant 0 : index
    %c0_4 = arith.constant 0 : index
    %6 = vector.load %arg4[%c0_3, %c0_4] : memref<80x256xbf16, #tpu.memory_space<vmem>>, vector<80x256xbf16>
    %cst = arith.constant dense<0.000000e+00> : vector<200x256xf32>
    %7 = tpu.matmul %5, %6, %cst {dimension_numbers = #tpu.dot_dimension_numbers<[1], [0], [0], [1], [0, 0, 1, 1], [], []>} : vector<200x80xbf16>, vector<80x256xbf16>, vector<200x256xf32> -> vector<200x256xf32>
    %c0_5 = arith.constant 0 : index
    %c0_6 = arith.constant 0 : index
    %8 = vector.load %arg5[%c0_5, %c0_6] : memref<1x256xf32, #tpu.memory_space<vmem>>, vector<1x256xf32>
    %9 = vector.broadcast %8 : vector<1x256xf32> to vector<200x256xf32>
    %10 = arith.addf %7, %9 : vector<200x256xf32>
    %cst_7 = arith.constant 0.000000e+00 : f32
    %11 = vector.broadcast %cst_7 : f32 to vector<200x256xf32>
    %12 = arith.maximumf %10, %11 : vector<200x256xf32>
    %c0_8 = arith.constant 0 : index
    %c0_9 = arith.constant 0 : index
    %13 = vector.load %arg7[%c0_8, %c0_9] : memref<1x256xf32, #tpu.memory_space<vmem>>, vector<1x256xf32>
    %cst_10 = arith.constant dense<0.000000e+00> : vector<256xf32>
    %14 = vector.multi_reduction <add>, %12, %cst_10 [0] : vector<200x256xf32> to vector<256xf32>
    %15 = vector.shape_cast %14 : vector<256xf32> to vector<1x256xf32>
    %16 = arith.addf %13, %15 : vector<1x256xf32>
    %c0_11 = arith.constant 0 : index
    %c0_12 = arith.constant 0 : index
    %17 = vector.load %arg7[%c0_11, %c0_12] : memref<1x256xf32, #tpu.memory_space<vmem>>, vector<1x256xf32>
    tpu.vector_store %arg7[%c0_11, %c0_12], %16 {strides = array<i32>} : memref<1x256xf32, #tpu.memory_space<vmem>>, vector<1x256xf32>,
    %c0_i32_13 = arith.constant 0 : i32
    %18 = arith.cmpi eq, %arg2, %c0_i32_13 : i32
    %19 = arith.extui %18 : i1 to i32
    %c0_i32_14 = arith.constant 0 : i32
    %20 = arith.cmpi ne, %19, %c0_i32_14 : i32
    scf.if %20 {
      %c0_15 = arith.constant 0 : index
      %c0_16 = arith.constant 0 : index
      %21 = vector.load %arg7[%c0_15, %c0_16] : memref<1x256xf32, #tpu.memory_space<vmem>>, vector<1x256xf32>
      %22 = vector.shape_cast %21 : vector<1x256xf32> to vector<1x1x256xf32>
      %cst_17 = arith.constant dense<0.000000e+00> : vector<1xf32>
      %23 = vector.multi_reduction <add>, %22, %cst_17 [1, 2] : vector<1x1x256xf32> to vector<1xf32>
      %24 = vector.shape_cast %23 : vector<1xf32> to vector<1x1x1xf32>
      %25 = vector.extract %24[0, 0, 0] : f32 from vector<1x1x1xf32>
      %cst_18 = arith.constant 1.95312496E-5 : f32
      %26 = arith.mulf %25, %cst_18 : f32
      %27 = vector.broadcast %26 : f32 to vector<1x1x8x128xf32>
      %c0_19 = arith.constant 0 : index
      %c0_20 = arith.constant 0 : index
      %c0_21 = arith.constant 0 : index
      %c0_22 = arith.constant 0 : index
      %28 = vector.load %arg6[%c0_19, %c0_20, %c0_21, %c0_22] : memref<1x1x8x128xf32, #tpu.memory_space<vmem>>, vector<1x1x8x128xf32>
      tpu.vector_store %arg6[%c0_19, %c0_20, %c0_21, %c0_22], %27 {strides = array<i32>} : memref<1x1x8x128xf32, #tpu.memory_space<vmem>>, vector<1x1x8x128xf32>,
    } else {
    }
    return
  }
  func.func @transform_0(%arg0: i32, %arg1: i32, %arg2: i32) -> (i32, i32, i32) {
    %c1_i32 = arith.constant 1 : i32
    %0 = arith.muli %arg1, %c1_i32 : i32
    %1 = arith.addi %0, %arg2 : i32
    %c0_i32 = arith.constant 0 : i32
    %2 = arith.minsi %1, %c0_i32 : i32
    %c0_i32_0 = arith.constant 0 : i32
    %c0_i32_1 = arith.constant 0 : i32
    return %arg0, %2, %c0_i32_0 : i32, i32, i32
  }
  func.func @transform_1(%arg0: i32, %arg1: i32, %arg2: i32) -> (i32, i32) {
    %c0_i32 = arith.constant 0 : i32
    %c0_i32_0 = arith.constant 0 : i32
    %c0_i32_1 = arith.constant 0 : i32
    return %c0_i32, %c0_i32_0 : i32, i32
  }
  func.func @transform_2(%arg0: i32, %arg1: i32, %arg2: i32) -> (i32, i32) {
    %c0_i32 = arith.constant 0 : i32
    %c0_i32_0 = arith.constant 0 : i32
    %c0_i32_1 = arith.constant 0 : i32
    return %c0_i32, %c0_i32_0 : i32, i32
  }
  func.func @transform_3(%arg0: i32, %arg1: i32, %arg2: i32) -> (i32, i32, i32, i32) {
    %c0_i32 = arith.constant 0 : i32
    %c0_i32_0 = arith.constant 0 : i32
    %c0_i32_1 = arith.constant 0 : i32
    return %arg0, %arg1, %c0_i32, %c0_i32_0 : i32, i32, i32, i32
  }
}

</mosaic_0001>

<llo_original>
// kernel: tpu_custom_call.1
$region0: #{tpu_custom_call.1}
  #allocation0 [shape = 'u32[]', space=smem, size = 0x4, offset = 0x4, fixed_abs, tag = 'smem constant byte address 0x4 - core index']
  #allocation1 [shape = 'u32[72,128]{1,0:T(1,128)}', space=vmem, size = 0x9000, scoped, tag = 'internal scratch']
  #allocation2 [shape = 'f32[1,256]{1,0:T(1,128)}', space=vmem, size = 0x400, scoped, tag = 'scratch operand']
  %s0 = inlined_call_operand.vmem [shape: f32[2,200,80], index: 0, kind: input, shape index: {}]
  %s1 = inlined_call_operand.vmem [shape: bf16[80,256], index: 1, kind: input, shape index: {}]
  %s2 = inlined_call_operand.vmem [shape: f32[1,256], index: 2, kind: input, shape index: {}]
  %s3 = inlined_call_operand.hbm [shape: f32[2,1,8,128], index: 3, kind: output, shape index: {}]
  %s4 = sld [smem:[#allocation0]]
  $region53: #{tpu_custom_call.1} parent=0
    _
  %s6 = ssub.s32 1, %s4
  %s7 = scalar_select 0, %s6, %s4
  $region1: #{tpu_custom_call.1} parent=0
    #allocation3 [shape = 'u8[8192]{0}', space=vmem, size = 0x2000, scoped, tag = 'output window, operand 0']
    #allocation4 [shape = 's32[2]{0}', space=sflag, size = 0x8, scoped, tag = 'scoped memory for tpu_custom_call.1']
    %8 = vsyncpa [#allocation4], 0
    %s9 = scalar_lea.sflag [#allocation4], 1
    %10 = vsyncpa %s9, 0
    loop: start=0, step=1, limit=4
    $region2: #{tpu_custom_call.1} parent=1 // loop_pre_header
      _
    $region3: #{tpu_custom_call.1} parent=1 // loop_header
      %s12 = sphi 0, %s16
      %p13 = scmp.ge.s32.totalorder %s12, 4
      %s19 = sphi 0, %s38
      %s20 = sphi 0, %s34
      %s21 = sphi 0, %s30
      %s22 = sphi 0, %s19
      %s23 = sphi 0, %s20
      %s24 = sphi 0, %s21
      %s25 = sphi 0, %s22
      %s26 = sphi 0, %s23
      %s27 = sphi 0, %s24
      %s49 = sphi 0, %s51
      %s52 = sphi 0, %s49
      %s53 = sphi 0, %s52
      %s69 = sphi 0, %s53
      %s73 = sphi 0, %s73
      %s75 = sphi 0, %s73
      %s76 = sphi 0, %s75
      %s90 = sphi 0, %s76
      %s94 = sphi 0, %s94
      %s96 = sphi 0, %s94
      %s97 = sphi 0, %s96
      %s111 = sphi 0, %s97
      %s119 = sphi 0, %s121
      %s122 = sphi 0, %s119
      %s123 = sphi 0, %s122
      %s139 = sphi 0, %s123
    $region4: #{tpu_custom_call.1} parent=1 // loop_header_branch
      %15 = sbr.rel (%p13) target = $region8
    $region5: #{tpu_custom_call.1} parent=1 // loop_body
      %s17 = ssub.s32 %s12, 1
      %s18 = ssub.s32 %s12, 2
      %s28 = sadd.s32 1, %s21
      %p29 = scmp.ge.s32.totalorder %s28, 1
      %s30 = scalar_select %p29, 0, %s28
      %s31 = sadd.s32 1, %s20
      %s32 = scalar_select %p29, %s31, %s20
      %p33 = scmp.ge.s32.totalorder %s32, 1
      %s34 = scalar_select %p33, 0, %s32
      %s35 = sadd.s32 1, %s19
      %s36 = scalar_select %p33, %s35, %s19
      %p37 = scmp.ge.s32.totalorder %s36, 2
      %s38 = scalar_select %p37, 0, %s36
      %s39 = sadd.s32 %s20, %s21
      %p40 = scmp.lt.s32.totalorder %s39, 0
      %s41 = scalar_select %p40, %s39, 0
      %s42 = sadd.s32 %s34, %s30
      %p43 = scmp.lt.s32.totalorder %s42, 0
      %s44 = scalar_select %p43, %s42, 0
      %s45 = ssub.s32 %s19, %s38
      %s46 = ssub.s32 %s41, %s44
      %s47 = sor.u32 %s45, %s46
      %p48 = scmp.eq.s32.totalorder %s47, 0
      %s50 = sadd.s32 %s49, 1
      %s51 = scalar_select %p48, %s49, %s50
      %p54 = pneg %p48
      %p55 = scmp.eq.s32.totalorder %s12, 1
      %p56 = por %p54, %p55
      %p57 = scmp.ne.s32.totalorder %s49, %s52
      %p58 = scmp.eq.s32.totalorder %s12, 0
      %p59 = por %p57, %p58
      %p60 = scmp.ne.s32.totalorder %s49, %s52
      %p61 = scmp.eq.s32.totalorder %s17, 1
      %p62 = por %p60, %p61
      %p63 = scmp.ne.s32.totalorder %s52, %s53
      %p64 = scmp.eq.s32.totalorder %s17, 0
      %p65 = por %p63, %p64
      %p66 = scmp.ne.s32.totalorder %s52, %s53
      %p67 = scmp.eq.s32.totalorder %s18, 1
      %p68 = por %p66, %p67
      %p70 = scmp.ne.s32.totalorder %s53, %s69
      %p71 = scmp.eq.s32.totalorder %s18, 0
      %p72 = por %p70, %p71
      %s74 = sadd.s32 %s73, 1
      %p77 = scmp.eq.s32.totalorder %s12, 1
      %p78 = scmp.ne.s32.totalorder %s73, %s75
      %p79 = scmp.eq.s32.totalorder %s12, 0
      %p80 = por %p78, %p79
      %p81 = scmp.ne.s32.totalorder %s73, %s75
      %p82 = scmp.eq.s32.totalorder %s17, 1
      %p83 = por %p81, %p82
      %p84 = scmp.ne.s32.totalorder %s75, %s76
      %p85 = scmp.eq.s32.totalorder %s17, 0
      %p86 = por %p84, %p85
      %p87 = scmp.ne.s32.totalorder %s75, %s76
      %p88 = scmp.eq.s32.totalorder %s18, 1
      %p89 = por %p87, %p88
      %p91 = scmp.ne.s32.totalorder %s76, %s90
      %p92 = scmp.eq.s32.totalorder %s18, 0
      %p93 = por %p91, %p92
      %s95 = sadd.s32 %s94, 1
      %p98 = scmp.eq.s32.totalorder %s12, 1
      %p99 = scmp.ne.s32.totalorder %s94, %s96
      %p100 = scmp.eq.s32.totalorder %s12, 0
      %p101 = por %p99, %p100
      %p102 = scmp.ne.s32.totalorder %s94, %s96
      %p103 = scmp.eq.s32.totalorder %s17, 1
      %p104 = por %p102, %p103
      %p105 = scmp.ne.s32.totalorder %s96, %s97
      %p106 = scmp.eq.s32.totalorder %s17, 0
      %p107 = por %p105, %p106
      %p108 = scmp.ne.s32.totalorder %s96, %s97
      %p109 = scmp.eq.s32.totalorder %s18, 1
      %p110 = por %p108, %p109
      %p112 = scmp.ne.s32.totalorder %s97, %s111
      %p113 = scmp.eq.s32.totalorder %s18, 0
      %p114 = por %p112, %p113
      %s115 = ssub.s32 %s19, %s38
      %s116 = ssub.s32 %s20, %s34
      %s117 = sor.u32 %s115, %s116
      %p118 = scmp.eq.s32.totalorder %s117, 0
      %s120 = sadd.s32 %s119, 1
      %s121 = scalar_select %p118, %s119, %s120
      %p124 = pneg %p118
      %p125 = scmp.eq.s32.totalorder %s12, 1
      %p126 = por %p124, %p125
      %p127 = scmp.ne.s32.totalorder %s119, %s122
      %p128 = scmp.eq.s32.totalorder %s12, 0
      %p129 = por %p127, %p128
      %p130 = scmp.ne.s32.totalorder %s119, %s122
      %p131 = scmp.eq.s32.totalorder %s17, 1
      %p132 = por %p130, %p131
      %p133 = scmp.ne.s32.totalorder %s122, %s123
      %p134 = scmp.eq.s32.totalorder %s17, 0
      %p135 = por %p133, %p134
      %p136 = scmp.ne.s32.totalorder %s122, %s123
      %p137 = scmp.eq.s32.totalorder %s18, 1
      %p138 = por %p136, %p137
      %p140 = scmp.ne.s32.totalorder %s123, %s139
      %p141 = scmp.eq.s32.totalorder %s18, 0
      %p142 = por %p140, %p141
      %p143 = scmp.le.s32.totalorder 1, %s12
      %p144 = scmp.lt.s32.totalorder %s12, 3
      %p145 = pnand %p143, %p144
      %p146 = pneg %p145
      // Predicated region
      $region9: #{tpu_custom_call.1} parent=5 // pred_check
        _
      $region10: #{tpu_custom_call.1} parent=5 // pred_check_branch
        %148 = sbr.rel (%p145) target = $region12
      $region11: #{tpu_custom_call.1} parent=5 // pred_region
        %s149 = ssub.s32 %s12, 1
        // Predicated region
        $region13: #{tpu_custom_call.1} parent=11 // pred_check
          %p150 = pneg %p86
        $region14: #{tpu_custom_call.1} parent=11 // pred_check_branch
          %152 = sbr.rel (%p150) target = $region16
        $region15: #{tpu_custom_call.1} parent=11 // pred_region
          _
        $region16: #{tpu_custom_call.1} parent=11 // pred_fallthru
          _
        // Predicated region
        $region17: #{tpu_custom_call.1} parent=11 // pred_check
          %p153 = pneg %p107
        $region18: #{tpu_custom_call.1} parent=11 // pred_check_branch
          %155 = sbr.rel (%p153) target = $region20
        $region19: #{tpu_custom_call.1} parent=11 // pred_region
          _
        $region20: #{tpu_custom_call.1} parent=11 // pred_fallthru
          _
      $region12: #{tpu_custom_call.1} parent=5 // pred_fallthru
        _
      %p156 = scmp.lt.s32.totalorder %s12, 2
      // Predicated region
      $region21: #{tpu_custom_call.1} parent=5 // pred_check
        %p157 = pneg %p156
      $region22: #{tpu_custom_call.1} parent=5 // pred_check_branch
        %159 = sbr.rel (%p157) target = $region24
      $region23: #{tpu_custom_call.1} parent=5 // pred_region
        // Predicated region
        $region25: #{tpu_custom_call.1} parent=23 // pred_check
          %p160 = pneg %p59
        $region26: #{tpu_custom_call.1} parent=23 // pred_check_branch
          %162 = sbr.rel (%p160) target = $region28
        $region27: #{tpu_custom_call.1} parent=23 // pred_region
          %s163 = sadd.s32 %s20, %s21
          %p164 = scmp.lt.s32.totalorder %s163, 0
          %s165 = scalar_select %p164, %s163, 0
          %s166 = smul.u32 25, %s165
          %p167 = scmp.lt.s32.totalorder %s19, 1
          %s168 = scalar_select %p167, %s19, 1
          %p169 = scmp.lt.s32.totalorder %s166, 24
          %s170 = scalar_select %p169, %s166, 24
          %s171 = smul.addr %s168, 25
          %s172 = sadd.s32 %s170, %s171
          %s173 = smul.addr %s172, 8
          %s174 = scalar_lea.vmem %s0, %s173
          %s175 = sadd.s32 %s20, %s21
          %p176 = scmp.lt.s32.totalorder %s175, 0
          %s177 = scalar_select %p176, %s175, 0
          %s178 = smul.u32 25, %s177
        $region28: #{tpu_custom_call.1} parent=23 // pred_fallthru
          _
      $region24: #{tpu_custom_call.1} parent=5 // pred_fallthru
        _
      %p179 = scmp.le.s32.totalorder 1, %s12
      %p180 = scmp.lt.s32.totalorder %s12, 3
      %p181 = pnand %p179, %p180
      %p182 = pneg %p181
      // Predicated region
      $region29: #{tpu_custom_call.1} parent=5 // pred_check
        _
      $region30: #{tpu_custom_call.1} parent=5 // pred_check_branch
        %184 = sbr.rel (%p181) target = $region32
      $region31: #{tpu_custom_call.1} parent=5 // pred_region
        %s185 = ssub.s32 %s12, 1
        %s186 = sadd.s32 %s23, %s24
        %p187 = scmp.lt.s32.totalorder %s186, 0
        %s188 = scalar_select %p187, %s186, 0
        %s189 = smul.u32 25, %s188
        %p190 = scmp.lt.s32.totalorder %s22, 1
        %s191 = scalar_select %p190, %s22, 1
        %p192 = scmp.lt.s32.totalorder %s189, 24
        %s193 = scalar_select %p192, %s189, 24
        %s194 = smul.addr %s191, 25
        %s195 = sadd.s32 %s193, %s194
        %s196 = smul.addr %s195, 8
        %s197 = scalar_lea.vmem %s0, %s196
        %p198 = pneg %p65
        %p199 = pneg %p62
        %p200 = pneg %p86
        %p201 = pneg %p83
        %p202 = pneg %p107
        %p203 = pneg %p104
        %p204 = pneg %p135
        %p205 = pneg %p132
        %s206 = sand.u32 %s122, 1
        %s207 = scalar_lea.sflag [#allocation4], %s206
        %s208 = sand.u32 %s122, 1
        %s209 = smul.addr %s208, 8
        %s210 = scalar_lea.vmem [#allocation3], %s209
        %s211 = sadd.s32 %s23, %s24
        %p212 = scmp.lt.s32.totalorder %s211, 0
        %s213 = scalar_select %p212, %s211, 0
        %s214 = smul.u32 25, %s213
        %p215 = scmp.lt.s32.totalorder %s22, 1
        %s216 = scalar_select %p215, %s22, 1
        %p217 = scmp.lt.s32.totalorder %s214, 24
        %s218 = scalar_select %p217, %s214, 24
        %s219 = smul.addr %s216, 25
        %s220 = sadd.s32 %s218, %s219
        %s221 = smul.addr %s220, 8
        %s222 = scalar_lea.vmem %s0, %s221
        %s223 = sadd.s32 %s23, %s24
        %p224 = scmp.lt.s32.totalorder %s223, 0
        %s225 = scalar_select %p224, %s223, 0
        %s226 = smul.u32 25, %s225
        %p228 = scmp.eq.s32.totalorder %s24, 0
        // Predicated region
        $region33: #{tpu_custom_call.1} parent=31 // pred_check
          %p229 = pneg %p228
        $region34: #{tpu_custom_call.1} parent=31 // pred_check_branch
          %231 = sbr.rel (%p229) target = $region36
        $region35: #{tpu_custom_call.1} parent=31 // pred_region
          %v232 = vlaneseq
          %vm233 = vcmp.ge.s32.totalorder %v232, 0
          %vm234 = vcmp.lt.s32.totalorder %v232, 256
          %vm235 = vmand %vm233, %vm234
          %236 = vst.msk [vmem:[#allocation2] sm:$0x3] %vm235, 0.0
        $region36: #{tpu_custom_call.1} parent=31 // pred_fallthru
          _
        %v237 = vld [vmem:[%s222] sm:$0xff]
        %v238 = vld [vmem:[%s222 + $0x8] sm:$0xff]
        %v239 = vld [vmem:[%s222 + $0x10] sm:$0xff]
        %v240 = vld [vmem:[%s222 + $0x18] sm:$0xff]
        %v241 = vld [vmem:[%s222 + $0x20] sm:$0xff]
        %v242 = vld [vmem:[%s222 + $0x28] sm:$0xff]
        %v243 = vld [vmem:[%s222 + $0x30] sm:$0xff]
        %v244 = vld [vmem:[%s222 + $0x38] sm:$0xff]
        %v245 = vld [vmem:[%s222 + $0x40] sm:$0xff]
        %v246 = vld [vmem:[%s222 + $0x48] sm:$0xff]
        %v247 = vld [vmem:[%s222 + $0x50] sm:$0xff]
        %v248 = vld [vmem:[%s222 + $0x58] sm:$0xff]
        %v249 = vld [vmem:[%s222 + $0x60] sm:$0xff]
        %v250 = vld [vmem:[%s222 + $0x68] sm:$0xff]
        %v251 = vld [vmem:[%s222 + $0x70] sm:$0xff]
        %v252 = vld [vmem:[%s222 + $0x78] sm:$0xff]
        %v253 = vld [vmem:[%s222 + $0x80] sm:$0xff]
        %v254 = vld [vmem:[%s222 + $0x88] sm:$0xff]
        %v255 = vld [vmem:[%s222 + $0x90] sm:$0xff]
        %v256 = vld [vmem:[%s222 + $0x98] sm:$0xff]
        %v257 = vld [vmem:[%s222 + $0xa0] sm:$0xff]
        %v258 = vld [vmem:[%s222 + $0xa8] sm:$0xff]
        %v259 = vld [vmem:[%s222 + $0xb0] sm:$0xff]
        %v260 = vld [vmem:[%s222 + $0xb8] sm:$0xff]
        %v261 = vld [vmem:[%s222 + $0xc0] sm:$0xff]
        %v262 = vpack.c.bf16 %v238, %v237
        %v263 = vpack.c.bf16 %v240, %v239
        %v264 = vpack.c.bf16 %v242, %v241
        %v265 = vpack.c.bf16 %v244, %v243
        %v266 = vpack.c.bf16 %v246, %v245
        %v267 = vpack.c.bf16 %v248, %v247
        %v268 = vpack.c.bf16 %v250, %v249
        %v269 = vpack.c.bf16 %v252, %v251
        %v270 = vpack.c.bf16 %v254, %v253
        %v271 = vpack.c.bf16 %v256, %v255
        %v272 = vpack.c.bf16 %v258, %v257
        %v273 = vpack.c.bf16 %v260, %v259
        %v274 = vpack.c.bf16 %v261, %v261
        %v275 = vld [vmem:[%s1] sm:$0xff]
        %v276 = vld [vmem:[%s1 + $0x8] sm:$0xff]
        %v277 = vld [vmem:[%s1 + $0x10] sm:$0xff]
        %v278 = vld [vmem:[%s1 + $0x18] sm:$0xff]
        %v279 = vld [vmem:[%s1 + $0x20] sm:$0xff]
        %v280 = vld [vmem:[%s1 + $0x28] sm:$0xff]
        %v281 = vld [vmem:[%s1 + $0x30] sm:$0xff]
        %v282 = vld [vmem:[%s1 + $0x38] sm:$0xff]
        %v283 = vld [vmem:[%s1 + $0x40] sm:$0xff]
        %v284 = vld [vmem:[%s1 + $0x48] sm:$0xff]
        %v285 = vld [vmem:[%s2] sm:$0x3]
        %v287 = vperm.slane %v285, 0
        %v288 = vperm.slane %v285, 1
        %v301 = vunpack.c.l.b16 %v275
        %v302 = vunpack.c.h.b16 %v275
        %v303 = vunpack.c.l.b16 %v276
        %v304 = vunpack.c.h.b16 %v276
        %v305 = vunpack.c.l.b16 %v277
        %v306 = vunpack.c.h.b16 %v277
        %v307 = vunpack.c.l.b16 %v278
        %v308 = vunpack.c.h.b16 %v278
        %v309 = vunpack.c.l.b16 %v279
        %v310 = vunpack.c.h.b16 %v279
        %v311 = vunpack.c.l.b16 %v280
        %v312 = vunpack.c.h.b16 %v280
        %v313 = vunpack.c.l.b16 %v281
        %v314 = vunpack.c.h.b16 %v281
        %v315 = vunpack.c.l.b16 %v282
        %v316 = vunpack.c.h.b16 %v282
        %v317 = vunpack.c.l.b16 %v283
        %v318 = vunpack.c.h.b16 %v283
        %v319 = vunpack.c.l.b16 %v284
        %v320 = vunpack.c.h.b16 %v284
        %v321 = vpack.c.b16 %v303, %v301
        %v322 = vpack.c.b16 %v304, %v302
        %v323 = vpack.c.b16 %v307, %v305
        %v324 = vpack.c.b16 %v308, %v306
        %v325 = vpack.c.b16 %v311, %v309
        %v326 = vpack.c.b16 %v312, %v310
        %v327 = vpack.c.b16 %v315, %v313
        %v328 = vpack.c.b16 %v316, %v314
        %v329 = vpack.c.b16 %v319, %v317
        %v330 = vpack.c.b16 %v320, %v318
        %vm341 = vcmask 654336
        %v343 = vsel %vm341, %v262, 0
        %v346 = vsel %vm341, %v263, 0
        %v349 = vsel %vm341, %v264, 0
        %v352 = vsel %vm341, %v265, 0
        %v355 = vsel %vm341, %v266, 0
        %v358 = vsel %vm341, %v267, 0
        %v361 = vsel %vm341, %v268, 0
        %v364 = vsel %vm341, %v269, 0
        %v367 = vsel %vm341, %v270, 0
        %v370 = vsel %vm341, %v271, 0
        %v373 = vsel %vm341, %v272, 0
        %v376 = vsel %vm341, %v273, 0
        %v379 = vsel %vm341, %v274, 0
        %381 = vmatpush.bf16.msra.mxu0 0
        %382 = vmatpush.bf16.msra.mxu0 0
        %383 = vmatpush.bf16.msra.mxu0 0
        %384 = vmatpush.bf16.msra.mxu0 %v329
        %385 = vmatpush.bf16.msra.mxu0 %v327
        %386 = vmatpush.bf16.msra.mxu0 %v325
        %387 = vmatpush.bf16.msra.mxu0 %v323
        %388 = vmatpush.bf16.msra.mxu0 %v321
        %389 = vmatmul.bf16.gmra.mxu0 %v343
        %v390 = vpop.f32.mrf.mxu0
        %v391 = vadd.f32 %v287, %v390
        %v392 = vpop.f32.mrf.mxu0
        %v393 = vadd.f32 %v287, %v392
        %394 = vmatmul.bf16.gmra.mxu0 %v346
        %v395 = vpop.f32.mrf.mxu0
        %v396 = vadd.f32 %v287, %v395
        %v397 = vpop.f32.mrf.mxu0
        %v398 = vadd.f32 %v287, %v397
        %399 = vmatmul.bf16.gmra.mxu0 %v349
        %v400 = vpop.f32.mrf.mxu0
        %v401 = vadd.f32 %v287, %v400
        %v402 = vpop.f32.mrf.mxu0
        %v403 = vadd.f32 %v287, %v402
        %404 = vmatmul.bf16.gmra.mxu0 %v352
        %v405 = vpop.f32.mrf.mxu0
        %v406 = vadd.f32 %v287, %v405
        %v407 = vpop.f32.mrf.mxu0
        %v408 = vadd.f32 %v287, %v407
        %409 = vmatmul.bf16.gmra.mxu0 %v355
        %v410 = vpop.f32.mrf.mxu0
        %v411 = vadd.f32 %v287, %v410
        %v412 = vpop.f32.mrf.mxu0
        %v413 = vadd.f32 %v287, %v412
        %414 = vmatmul.bf16.gmra.mxu0 %v358
        %v415 = vpop.f32.mrf.mxu0
        %v416 = vadd.f32 %v287, %v415
        %v417 = vpop.f32.mrf.mxu0
        %v418 = vadd.f32 %v287, %v417
        %419 = vmatmul.bf16.gmra.mxu0 %v361
        %v420 = vpop.f32.mrf.mxu0
        %v421 = vadd.f32 %v287, %v420
        %v422 = vpop.f32.mrf.mxu0
        %v423 = vadd.f32 %v287, %v422
        %424 = vmatmul.bf16.gmra.mxu0 %v364
        %v425 = vpop.f32.mrf.mxu0
        %v426 = vadd.f32 %v287, %v425
        %v427 = vpop.f32.mrf.mxu0
        %v428 = vadd.f32 %v287, %v427
        %429 = vmatmul.bf16.gmra.mxu0 %v367
        %v430 = vpop.f32.mrf.mxu0
        %v431 = vadd.f32 %v287, %v430
        %v432 = vpop.f32.mrf.mxu0
        %v433 = vadd.f32 %v287, %v432
        %434 = vmatmul.bf16.gmra.mxu0 %v370
        %v435 = vpop.f32.mrf.mxu0
        %v436 = vadd.f32 %v287, %v435
        %v437 = vpop.f32.mrf.mxu0
        %v438 = vadd.f32 %v287, %v437
        %439 = vmatmul.bf16.gmra.mxu0 %v373
        %v440 = vpop.f32.mrf.mxu0
        %v441 = vadd.f32 %v287, %v440
        %v442 = vpop.f32.mrf.mxu0
        %v443 = vadd.f32 %v287, %v442
        %444 = vmatmul.bf16.gmra.mxu0 %v376
        %v445 = vpop.f32.mrf.mxu0
        %v446 = vadd.f32 %v287, %v445
        %v447 = vpop.f32.mrf.mxu0
        %v448 = vadd.f32 %v287, %v447
        %449 = vmatmul.bf16.gmra.mxu0 %v379
        %v450 = vpop.f32.mrf.mxu0
        %v451 = vadd.f32 %v287, %v450
        %v452 = vpop.f32.mrf.mxu0
        %453 = vdwg.mxu0
        %454 = vmatpush.bf16.msra.mxu0 0
        %455 = vmatpush.bf16.msra.mxu0 0
        %456 = vmatpush.bf16.msra.mxu0 0
        %457 = vmatpush.bf16.msra.mxu0 %v330
        %458 = vmatpush.bf16.msra.mxu0 %v328
        %459 = vmatpush.bf16.msra.mxu0 %v326
        %460 = vmatpush.bf16.msra.mxu0 %v324
        %461 = vmatpush.bf16.msra.mxu0 %v322
        %462 = vmatmul.bf16.gmra.mxu0 %v343
        %v463 = vpop.f32.mrf.mxu0
        %v464 = vadd.f32 %v288, %v463
        %v465 = vpop.f32.mrf.mxu0
        %v466 = vadd.f32 %v288, %v465
        %467 = vmatmul.bf16.gmra.mxu0 %v346
        %v468 = vpop.f32.mrf.mxu0
        %v469 = vadd.f32 %v288, %v468
        %v470 = vpop.f32.mrf.mxu0
        %v471 = vadd.f32 %v288, %v470
        %472 = vmatmul.bf16.gmra.mxu0 %v349
        %v473 = vpop.f32.mrf.mxu0
        %v474 = vadd.f32 %v288, %v473
        %v475 = vpop.f32.mrf.mxu0
        %v476 = vadd.f32 %v288, %v475
        %477 = vmatmul.bf16.gmra.mxu0 %v352
        %v478 = vpop.f32.mrf.mxu0
        %v479 = vadd.f32 %v288, %v478
        %v480 = vpop.f32.mrf.mxu0
        %v481 = vadd.f32 %v288, %v480
        %482 = vmatmul.bf16.gmra.mxu0 %v355
        %v483 = vpop.f32.mrf.mxu0
        %v484 = vadd.f32 %v288, %v483
        %v485 = vpop.f32.mrf.mxu0
        %v486 = vadd.f32 %v288, %v485
        %487 = vmatmul.bf16.gmra.mxu0 %v358
        %v488 = vpop.f32.mrf.mxu0
        %v489 = vadd.f32 %v288, %v488
        %v490 = vpop.f32.mrf.mxu0
        %v491 = vadd.f32 %v288, %v490
        %492 = vmatmul.bf16.gmra.mxu0 %v361
        %v493 = vpop.f32.mrf.mxu0
        %v494 = vadd.f32 %v288, %v493
        %v495 = vpop.f32.mrf.mxu0
        %v496 = vadd.f32 %v288, %v495
        %497 = vmatmul.bf16.gmra.mxu0 %v364
        %v498 = vpop.f32.mrf.mxu0
        %v499 = vadd.f32 %v288, %v498
        %v500 = vpop.f32.mrf.mxu0
        %v501 = vadd.f32 %v288, %v500
        %502 = vmatmul.bf16.gmra.mxu0 %v367
        %v503 = vpop.f32.mrf.mxu0
        %v504 = vadd.f32 %v288, %v503
        %v505 = vpop.f32.mrf.mxu0
        %v506 = vadd.f32 %v288, %v505
        %507 = vmatmul.bf16.gmra.mxu0 %v370
        %v508 = vpop.f32.mrf.mxu0
        %v509 = vadd.f32 %v288, %v508
        %v510 = vpop.f32.mrf.mxu0
        %v511 = vadd.f32 %v288, %v510
        %512 = vmatmul.bf16.gmra.mxu0 %v373
        %v513 = vpop.f32.mrf.mxu0
        %v514 = vadd.f32 %v288, %v513
        %v515 = vpop.f32.mrf.mxu0
        %v516 = vadd.f32 %v288, %v515
        %517 = vmatmul.bf16.gmra.mxu0 %v376
        %v518 = vpop.f32.mrf.mxu0
        %v519 = vadd.f32 %v288, %v518
        %v520 = vpop.f32.mrf.mxu0
        %v521 = vadd.f32 %v288, %v520
        %522 = vmatmul.bf16.gmra.mxu0 %v379
        %v523 = vpop.f32.mrf.mxu0
        %v524 = vadd.f32 %v288, %v523
        %v525 = vpop.f32.mrf.mxu0
        %526 = vdwg.mxu0
        %v527 = vmax.f32 %v391, 0.0
        %v528 = vmax.f32 %v464, 0.0
        %v529 = vmax.f32 %v393, 0.0
        %v530 = vmax.f32 %v466, 0.0
        %v531 = vmax.f32 %v396, 0.0
        %v532 = vmax.f32 %v469, 0.0
        %v533 = vmax.f32 %v398, 0.0
        %v534 = vmax.f32 %v471, 0.0
        %v535 = vmax.f32 %v401, 0.0
        %v536 = vmax.f32 %v474, 0.0
        %v537 = vmax.f32 %v403, 0.0
        %v538 = vmax.f32 %v476, 0.0
        %v539 = vmax.f32 %v406, 0.0
        %v540 = vmax.f32 %v479, 0.0
        %v541 = vmax.f32 %v408, 0.0
        %v542 = vmax.f32 %v481, 0.0
        %v543 = vmax.f32 %v411, 0.0
        %v544 = vmax.f32 %v484, 0.0
        %v545 = vmax.f32 %v413, 0.0
        %v546 = vmax.f32 %v486, 0.0
        %v547 = vmax.f32 %v416, 0.0
        %v548 = vmax.f32 %v489, 0.0
        %v549 = vmax.f32 %v418, 0.0
        %v550 = vmax.f32 %v491, 0.0
        %v551 = vmax.f32 %v421, 0.0
        %v552 = vmax.f32 %v494, 0.0
        %v553 = vmax.f32 %v423, 0.0
        %v554 = vmax.f32 %v496, 0.0
        %v555 = vmax.f32 %v426, 0.0
        %v556 = vmax.f32 %v499, 0.0
        %v557 = vmax.f32 %v428, 0.0
        %v558 = vmax.f32 %v501, 0.0
        %v559 = vmax.f32 %v431, 0.0
        %v560 = vmax.f32 %v504, 0.0
        %v561 = vmax.f32 %v433, 0.0
        %v562 = vmax.f32 %v506, 0.0
        %v563 = vmax.f32 %v436, 0.0
        %v564 = vmax.f32 %v509, 0.0
        %v565 = vmax.f32 %v438, 0.0
        %v566 = vmax.f32 %v511, 0.0
        %v567 = vmax.f32 %v441, 0.0
        %v568 = vmax.f32 %v514, 0.0
        %v569 = vmax.f32 %v443, 0.0
        %v570 = vmax.f32 %v516, 0.0
        %v571 = vmax.f32 %v446, 0.0
        %v572 = vmax.f32 %v519, 0.0
        %v573 = vmax.f32 %v448, 0.0
        %v574 = vmax.f32 %v521, 0.0
        %v575 = vmax.f32 %v451, 0.0
        %v576 = vmax.f32 %v524, 0.0
        %v577 = vld [vmem:[#allocation2] sm:$0x3]
        %v578 = vadd.f32 %v527, %v529
        %v579 = vadd.f32 %v578, %v531
        %v580 = vadd.f32 %v579, %v533
        %v581 = vadd.f32 %v580, %v535
        %v582 = vadd.f32 %v581, %v537
        %v583 = vadd.f32 %v582, %v539
        %v584 = vadd.f32 %v583, %v541
        %v585 = vadd.f32 %v584, %v543
        %v586 = vadd.f32 %v585, %v545
        %v587 = vadd.f32 %v586, %v547
        %v588 = vadd.f32 %v587, %v549
        %v589 = vadd.f32 %v588, %v551
        %v590 = vadd.f32 %v589, %v553
        %v591 = vadd.f32 %v590, %v555
        %v592 = vadd.f32 %v591, %v557
        %v593 = vadd.f32 %v592, %v559
        %v594 = vadd.f32 %v593, %v561
        %v595 = vadd.f32 %v594, %v563
        %v596 = vadd.f32 %v595, %v565
        %v597 = vadd.f32 %v596, %v567
        %v598 = vadd.f32 %v597, %v569
        %v599 = vadd.f32 %v598, %v571
        %v600 = vadd.f32 %v599, %v573
        %v601 = vadd.f32 %v600, %v575
        %v602 = vrot.slane %v601, 4
        %v603 = vadd.f32 %v601, %v602
        %v604 = vrot.slane %v603, 2
        %v605 = vadd.f32 %v603, %v604
        %v606 = vrot.slane %v605, 1
        %v607 = vadd.f32 %v605, %v606
        %v608 = vadd.f32 %v528, %v530
        %v609 = vadd.f32 %v608, %v532
        %v610 = vadd.f32 %v609, %v534
        %v611 = vadd.f32 %v610, %v536
        %v612 = vadd.f32 %v611, %v538
        %v613 = vadd.f32 %v612, %v540
        %v614 = vadd.f32 %v613, %v542
        %v615 = vadd.f32 %v614, %v544
        %v616 = vadd.f32 %v615, %v546
        %v617 = vadd.f32 %v616, %v548
        %v618 = vadd.f32 %v617, %v550
        %v619 = vadd.f32 %v618, %v552
        %v620 = vadd.f32 %v619, %v554
        %v621 = vadd.f32 %v620, %v556
        %v622 = vadd.f32 %v621, %v558
        %v623 = vadd.f32 %v622, %v560
        %v624 = vadd.f32 %v623, %v562
        %v625 = vadd.f32 %v624, %v564
        %v626 = vadd.f32 %v625, %v566
        %v627 = vadd.f32 %v626, %v568
        %v628 = vadd.f32 %v627, %v570
        %v629 = vadd.f32 %v628, %v572
        %v630 = vadd.f32 %v629, %v574
        %v631 = vadd.f32 %v630, %v576
        %v632 = vrot.slane %v631, 4
        %v633 = vadd.f32 %v631, %v632
        %v634 = vrot.slane %v633, 2
        %v635 = vadd.f32 %v633, %v634
        %v636 = vrot.slane %v635, 1
        %v637 = vadd.f32 %v635, %v636
        %v640 = vrot.slane %v637, 7
        %vm641 = vcmask 1040384
        %v642 = vsel %vm641, %v607, %v640
        %v644 = vadd.f32 %v577, %v642
        %v645 = vlaneseq
        %vm646 = vcmp.ge.s32.totalorder %v645, 0
        %vm647 = vcmp.lt.s32.totalorder %v645, 256
        %vm648 = vmand %vm646, %vm647
        %649 = vst.msk [vmem:[#allocation2] sm:$0x3] %vm648, %v644
        // Predicated region
        $region37: #{tpu_custom_call.1} parent=31 // pred_check
          %p650 = pneg %p228
        $region38: #{tpu_custom_call.1} parent=31 // pred_check_branch
          %652 = sbr.rel (%p650) target = $region40
        $region39: #{tpu_custom_call.1} parent=31 // pred_region
          %v653 = vld [vmem:[#allocation2] sm:$0x3]
          %v655 = vperm.slane %v653, 0
          %v656 = vperm.slane %v653, 1
          %v659 = vsel %vm641, %v655, 0.0
          %v660 = vsel %vm641, %v656, 0.0
          %v661 = vadd.f32 %v659, %v660
          %662 = vadd.xlane.f32.xlu0 %v661
          %v663 = vpop.xlane.xlu0 %662
          %v664 = vrot.slane %v663, 4
          %v665 = vadd.f32 %v663, %v664
          %v666 = vrot.slane %v665, 2
          %v667 = vadd.f32 %v665, %v666
          %v668 = vrot.slane %v667, 1
          %v669 = vadd.f32 %v667, %v668
          %s670 = vtos %v669
          %s671 = smul.f32 %s670, 1.953125e-05
          %v672 = vstv %s671
          %673 = vst [vmem:[%s210] sm:$0xff] %v672
        $region40: #{tpu_custom_call.1} parent=31 // pred_fallthru
          _
        %s674 = sand.u32 %s122, 1
        %s675 = scalar_lea.sflag [#allocation4], %s674
        %s676 = sand.u32 %s122, 1
        %s677 = smul.addr %s676, 8
        %s678 = scalar_lea.vmem [#allocation3], %s677
        // Predicated region
        $region41: #{tpu_custom_call.1} parent=31 // pred_check
          %p679 = pneg %p132
        $region42: #{tpu_custom_call.1} parent=31 // pred_check_branch
          %681 = sbr.rel (%p679) target = $region44
        $region43: #{tpu_custom_call.1} parent=31 // pred_region
          %683 = vsyncadd %s675, 0
          %s684 = sadd.s32 %s23, %s22
          %s685 = smul.addr %s684, 8
          %s686 = scalar_lea.hbm %s3, %s685
          %s688 = sshll.u32 %s678, 4
          %s689 = int_to_ptr.vmem [resolvable:$true] %s688
          %s690 = sshll.u32 %s686, 4
          %s691 = int_to_ptr.hbm [resolvable:$true] %s690
          %693 = dma.vmem_to_hbm [thread:$0]  %s689, 128, %s691, %s675
        $region44: #{tpu_custom_call.1} parent=31 // pred_fallthru
          _
      $region32: #{tpu_custom_call.1} parent=5 // pred_fallthru
        _
      %p694 = scmp.le.s32.totalorder 2, %s12
      // Predicated region
      $region45: #{tpu_custom_call.1} parent=5 // pred_check
        %p695 = pneg %p694
      $region46: #{tpu_custom_call.1} parent=5 // pred_check_branch
        %697 = sbr.rel (%p695) target = $region48
      $region47: #{tpu_custom_call.1} parent=5 // pred_region
        %s698 = ssub.s32 %s12, 2
        // Predicated region
        $region49: #{tpu_custom_call.1} parent=47 // pred_check
          %p699 = pneg %p138
        $region50: #{tpu_custom_call.1} parent=47 // pred_check_branch
          %701 = sbr.rel (%p699) target = $region52
        $region51: #{tpu_custom_call.1} parent=47 // pred_region
          %s702 = sand.u32 %s123, 1
          %s703 = scalar_lea.sflag [#allocation4], %s702
          %s704 = sand.u32 %s123, 1
          %s705 = smul.addr %s704, 8
          %s706 = scalar_lea.vmem [#allocation3], %s705
          %708 = dma.done %s703, 128
        $region52: #{tpu_custom_call.1} parent=47 // pred_fallthru
          _
      $region48: #{tpu_custom_call.1} parent=5 // pred_fallthru
        _
    $region6: #{tpu_custom_call.1} parent=1 // loop_footer
      %s16 = sadd.s32 1, %s12
    $region7: #{tpu_custom_call.1} parent=1 // loop_footer_branch
      %11 = sbr.rel target = $region3
    $region8: #{tpu_custom_call.1} parent=1 // loop_exit
      _
    %709 = vsyncpa [#allocation4], 1
    %s710 = scalar_lea.sflag [#allocation4], 1
    %711 = vsyncpa %s710, 1

</llo_original>
